<compile_context>
chip_gen: v5e
topology: v5e:2x2
jax: 0.10.0
libtpu: 0.0.40
codegen_flags: <defaults>
</compile_context>

<pallas_src>
import math

import jax
import jax.numpy as jnp
from jax.experimental import pallas as pl
from jax.experimental.pallas import tpu as pltpu


NEG_SLOPE = 0.01  # nn.LeakyReLU default


def make_mlp_kernel(n_linear: int):
    """Fused-MLP kernel for a fixed number of Linear layers (transposed layout)."""

    def kernel(*refs):
        # refs = (x_ref, w0, b0, w1, b1, ..., w_{L-1}, b_{L-1}, out_ref)
        x_ref = refs[0]
        out_ref = refs[-1]

        h = x_ref[...]  # (in_features, B_TILE), bf16 — batch on lanes
        for i in range(n_linear):
            w = refs[1 + 2 * i][...]  # (out, in) bf16 (PyTorch layout, pre-packed)
            b = refs[2 + 2 * i][...]  # (out, 1)  f32
            # MXU: bf16 x bf16 -> f32 accumulate; bias add in f32 on the VPU.
            acc = jnp.dot(w, h, preferred_element_type=jnp.float32) + b
            if i < n_linear - 1:
                acc = jnp.maximum(acc, NEG_SLOPE * acc)  # LeakyReLU, single vmax
                h = acc.astype(jnp.bfloat16)             # back to bf16 for next MXU pass
            else:
                out_ref[...] = acc.astype(out_ref.dtype)  # lane-dense (ntargets, B_TILE)

    return kernel


def _round_up(x: int, m: int) -> int:
    return ((x + m - 1) // m) * m


def mlp_forward(x, weights, biases, *, b_tile=1024, compute_dtype=jnp.bfloat16):
    """Run the fused MLP Pallas kernel.

    x:       (B, nfeatures) float32
    weights: list of (out, in) arrays (PyTorch layout), pre-packed to bf16
    biases:  list of (out, 1) float32 arrays
    returns: (B, ntargets) float32
    """
    assert len(weights) == len(biases)
    n_linear = len(weights)
    B, nfeat = x.shape
    ntargets = weights[-1].shape[0]

    # Batch-last layout: (nfeatures, B) with the long axis contiguous on lanes.
    xt = x.T.astype(compute_dtype)
    tb = min(b_tile, _round_up(B, 128))   # lane-dense tile, multiple of 128
    B_pad = _round_up(B, tb)
    if B_pad != B:
        xt = jnp.pad(xt, ((0, 0), (0, B_pad - B)))
    grid = (B_pad // tb,)

    args = [xt]
    in_specs = [pl.BlockSpec((nfeat, tb), lambda i: (0, i))]
    for w, b in zip(weights, biases):
        args.append(w)
        args.append(b)
        # Weights/biases are tiny and resident across the whole batch grid.
        in_specs.append(pl.BlockSpec(w.shape, lambda i: (0, 0)))
        in_specs.append(pl.BlockSpec(b.shape, lambda i: (0, 0)))
    out_spec = pl.BlockSpec((ntargets, tb), lambda i: (0, i))

    flops = 2 * B_pad * sum(int(w.shape[0]) * int(w.shape[1]) for w in weights)
    bytes_accessed = (
        xt.size * xt.dtype.itemsize
        + sum(int(a.size) * a.dtype.itemsize for a in args[1:])
        + B_pad * ntargets * 4
    )

    out_t = pl.pallas_call(
        make_mlp_kernel(n_linear),
        out_shape=jax.ShapeDtypeStruct((ntargets, B_pad), jnp.float32),
        grid=grid,
        in_specs=in_specs,
        out_specs=out_spec,
        compiler_params=pltpu.CompilerParams(
            dimension_semantics=("parallel",),
        ),
        cost_estimate=pl.CostEstimate(
            flops=flops, transcendentals=0, bytes_accessed=bytes_accessed
        ),
    )(*args)

    # Back to PyTorch's (B, ntargets), dropping batch padding.
    return out_t[:, :B].T


def init_params(key, nfeatures, ntargets, nlayers, hidden_size,
                param_dtype=jnp.bfloat16):
    """PyTorch-style (uniform +/- 1/sqrt(fan_in)) init; weights packed once to bf16."""
    dims = []  # (out, in) == PyTorch Linear.weight layout
    in_dim = nfeatures
    for _ in range(nlayers):
        dims.append((hidden_size, in_dim))
        in_dim = hidden_size
    dims.append((ntargets, in_dim))

    weights, biases = [], []
    for (fan_out, fan_in) in dims:
        key, kw, kb = jax.random.split(key, 3)
        bound = 1.0 / math.sqrt(fan_in)
        w = jax.random.uniform(kw, (fan_out, fan_in), jnp.float32, -bound, bound)
        b = jax.random.uniform(kb, (fan_out, 1), jnp.float32, -bound, bound)
        weights.append(w.astype(param_dtype))  # bf16 MXU operands, packed once
        biases.append(b)                       # f32 (added after f32 accumulation)
    return weights, biases


def reference_forward(x, weights, biases, compute_dtype=jnp.bfloat16):
    """Plain-JAX reference mirroring the kernel's bf16-operand / f32-accumulate math."""
    h = x.astype(compute_dtype)
    n = len(weights)
    for i, (w, b) in enumerate(zip(weights, biases)):
        acc = jnp.dot(h, w.T, preferred_element_type=jnp.float32) + b[:, 0]
        if i < n - 1:
            acc = jnp.maximum(acc, NEG_SLOPE * acc)
            h = acc.astype(compute_dtype)
        else:
            h = acc
    return h


if __name__ == "__main__":
    # Module hyper-parameters (dropout is unused by the reference forward pass).
    nfeatures, ntargets = 6, 1
    nlayers, hidden_size, dropout = 3, 32, 0.2

    key = jax.random.PRNGKey(0)
    key, kp = jax.random.split(key)
    weights, biases = init_params(kp, nfeatures, ntargets, nlayers, hidden_size)

    # Two cases: multi-tile batch grid (512 rows, 128-wide tiles -> grid=(4,))
    # and a ragged small batch (40 rows -> padded to one 128-wide tile).
    for batch, tile in ((512, 128), (40, 1024)):
        key, kx = jax.random.split(key)
        x = jax.random.normal(kx, (batch, nfeatures), jnp.float32)

        out = jax.block_until_ready(mlp_forward(x, weights, biases, b_tile=tile))
        ref = reference_forward(x, weights, biases)

        assert out.shape == (batch, ntargets), (out.shape, (batch, ntargets))
        assert jnp.allclose(out, ref, atol=1e-3, rtol=1e-3), "mismatch vs reference"

    print("KERNEL_OK")
</pallas_src>

<mosaic_0001>
module attributes {stable_mosaic.version = 11 : i64} {
  func.func @kernel(%arg0: i32, %arg1: memref<6x128xbf16, #tpu.memory_space<vmem>>, %arg2: memref<32x6xbf16, #tpu.memory_space<vmem>>, %arg3: memref<32x1xf32, #tpu.memory_space<vmem>>, %arg4: memref<32x32xbf16, #tpu.memory_space<vmem>>, %arg5: memref<32x1xf32, #tpu.memory_space<vmem>>, %arg6: memref<32x32xbf16, #tpu.memory_space<vmem>>, %arg7: memref<32x1xf32, #tpu.memory_space<vmem>>, %arg8: memref<1x32xbf16, #tpu.memory_space<vmem>>, %arg9: memref<1x1xf32, #tpu.memory_space<vmem>>, %arg10: memref<1x128xf32, #tpu.memory_space<vmem>>) attributes {dimension_semantics = [#tpu.dimension_semantics<parallel>], iteration_bounds = array<i64: 4>, scalar_prefetch = 0 : i64, scratch_operands = 0 : i64, tpu.core_type = #tpu.core_type<tc>, window_params = [{transform_indices = @transform_0, window_bounds = array<i64: 6, 128>}, {pipeline_mode = #tpu.pipeline_mode<synchronous>, transform_indices = @transform_1, window_bounds = array<i64: 32, 6>}, {pipeline_mode = #tpu.pipeline_mode<synchronous>, transform_indices = @transform_2, window_bounds = array<i64: 32, 1>}, {pipeline_mode = #tpu.pipeline_mode<synchronous>, transform_indices = @transform_3, window_bounds = array<i64: 32, 32>}, {pipeline_mode = #tpu.pipeline_mode<synchronous>, transform_indices = @transform_4, window_bounds = array<i64: 32, 1>}, {pipeline_mode = #tpu.pipeline_mode<synchronous>, transform_indices = @transform_5, window_bounds = array<i64: 32, 32>}, {pipeline_mode = #tpu.pipeline_mode<synchronous>, transform_indices = @transform_6, window_bounds = array<i64: 32, 1>}, {pipeline_mode = #tpu.pipeline_mode<synchronous>, transform_indices = @transform_7, window_bounds = array<i64: 1, 32>}, {pipeline_mode = #tpu.pipeline_mode<synchronous>, transform_indices = @transform_8, window_bounds = array<i64: 1, 1>}, {transform_indices = @transform_9, window_bounds = array<i64: 1, 128>}]} {
    %c0 = arith.constant 0 : index
    %c0_0 = arith.constant 0 : index
    %0 = vector.load %arg1[%c0, %c0_0] : memref<6x128xbf16, #tpu.memory_space<vmem>>, vector<6x128xbf16>
    %c0_1 = arith.constant 0 : index
    %c0_2 = arith.constant 0 : index
    %1 = vector.load %arg2[%c0_1, %c0_2] : memref<32x6xbf16, #tpu.memory_space<vmem>>, vector<32x6xbf16>
    %c0_3 = arith.constant 0 : index
    %c0_4 = arith.constant 0 : index
    %2 = vector.load %arg3[%c0_3, %c0_4] : memref<32x1xf32, #tpu.memory_space<vmem>>, vector<32x1xf32>
    %cst = arith.constant dense<0.000000e+00> : vector<32x128xf32>
    %3 = tpu.matmul %1, %0, %cst {dimension_numbers = #tpu.dot_dimension_numbers<[1], [0], [0], [1], [0, 0, 1, 1], [], []>} : vector<32x6xbf16>, vector<6x128xbf16>, vector<32x128xf32> -> vector<32x128xf32>
    %4 = vector.broadcast %2 : vector<32x1xf32> to vector<32x128xf32>
    %5 = arith.addf %3, %4 : vector<32x128xf32>
    %cst_5 = arith.constant 0.00999999977 : f32
    %6 = vector.broadcast %cst_5 : f32 to vector<32x128xf32>
    %7 = arith.mulf %6, %5 : vector<32x128xf32>
    %8 = arith.maximumf %5, %7 : vector<32x128xf32>
    %9 = arith.truncf %8 : vector<32x128xf32> to vector<32x128xbf16>
    %c0_6 = arith.constant 0 : index
    %c0_7 = arith.constant 0 : index
    %10 = vector.load %arg4[%c0_6, %c0_7] : memref<32x32xbf16, #tpu.memory_space<vmem>>, vector<32x32xbf16>
    %c0_8 = arith.constant 0 : index
    %c0_9 = arith.constant 0 : index
    %11 = vector.load %arg5[%c0_8, %c0_9] : memref<32x1xf32, #tpu.memory_space<vmem>>, vector<32x1xf32>
    %cst_10 = arith.constant dense<0.000000e+00> : vector<32x128xf32>
    %12 = tpu.matmul %10, %9, %cst_10 {dimension_numbers = #tpu.dot_dimension_numbers<[1], [0], [0], [1], [0, 0, 1, 1], [], []>} : vector<32x32xbf16>, vector<32x128xbf16>, vector<32x128xf32> -> vector<32x128xf32>
    %13 = vector.broadcast %11 : vector<32x1xf32> to vector<32x128xf32>
    %14 = arith.addf %12, %13 : vector<32x128xf32>
    %cst_11 = arith.constant 0.00999999977 : f32
    %15 = vector.broadcast %cst_11 : f32 to vector<32x128xf32>
    %16 = arith.mulf %15, %14 : vector<32x128xf32>
    %17 = arith.maximumf %14, %16 : vector<32x128xf32>
    %18 = arith.truncf %17 : vector<32x128xf32> to vector<32x128xbf16>
    %c0_12 = arith.constant 0 : index
    %c0_13 = arith.constant 0 : index
    %19 = vector.load %arg6[%c0_12, %c0_13] : memref<32x32xbf16, #tpu.memory_space<vmem>>, vector<32x32xbf16>
    %c0_14 = arith.constant 0 : index
    %c0_15 = arith.constant 0 : index
    %20 = vector.load %arg7[%c0_14, %c0_15] : memref<32x1xf32, #tpu.memory_space<vmem>>, vector<32x1xf32>
    %cst_16 = arith.constant dense<0.000000e+00> : vector<32x128xf32>
    %21 = tpu.matmul %19, %18, %cst_16 {dimension_numbers = #tpu.dot_dimension_numbers<[1], [0], [0], [1], [0, 0, 1, 1], [], []>} : vector<32x32xbf16>, vector<32x128xbf16>, vector<32x128xf32> -> vector<32x128xf32>
    %22 = vector.broadcast %20 : vector<32x1xf32> to vector<32x128xf32>
    %23 = arith.addf %21, %22 : vector<32x128xf32>
    %cst_17 = arith.constant 0.00999999977 : f32
    %24 = vector.broadcast %cst_17 : f32 to vector<32x128xf32>
    %25 = arith.mulf %24, %23 : vector<32x128xf32>
    %26 = arith.maximumf %23, %25 : vector<32x128xf32>
    %27 = arith.truncf %26 : vector<32x128xf32> to vector<32x128xbf16>
    %c0_18 = arith.constant 0 : index
    %c0_19 = arith.constant 0 : index
    %28 = vector.load %arg8[%c0_18, %c0_19] : memref<1x32xbf16, #tpu.memory_space<vmem>>, vector<1x32xbf16>
    %c0_20 = arith.constant 0 : index
    %c0_21 = arith.constant 0 : index
    %29 = vector.load %arg9[%c0_20, %c0_21] : memref<1x1xf32, #tpu.memory_space<vmem>>, vector<1x1xf32>
    %cst_22 = arith.constant dense<0.000000e+00> : vector<1x128xf32>
    %30 = tpu.matmul %28, %27, %cst_22 {dimension_numbers = #tpu.dot_dimension_numbers<[1], [0], [0], [1], [0, 0, 1, 1], [], []>} : vector<1x32xbf16>, vector<32x128xbf16>, vector<1x128xf32> -> vector<1x128xf32>
    %31 = vector.broadcast %29 : vector<1x1xf32> to vector<1x128xf32>
    %32 = arith.addf %30, %31 : vector<1x128xf32>
    %c0_23 = arith.constant 0 : index
    %c0_24 = arith.constant 0 : index
    %33 = vector.load %arg10[%c0_23, %c0_24] : memref<1x128xf32, #tpu.memory_space<vmem>>, vector<1x128xf32>
    tpu.vector_store %arg10[%c0_23, %c0_24], %32 {strides = array<i32>} : memref<1x128xf32, #tpu.memory_space<vmem>>, vector<1x128xf32>,
    return
  }
  func.func @transform_0(%arg0: i32) -> (i32, i32) {
    %c0_i32 = arith.constant 0 : i32
    %c0_i32_0 = arith.constant 0 : i32
    return %c0_i32, %arg0 : i32, i32
  }
  func.func @transform_1(%arg0: i32) -> (i32, i32) {
    %c0_i32 = arith.constant 0 : i32
    %c0_i32_0 = arith.constant 0 : i32
    %c0_i32_1 = arith.constant 0 : i32
    return %c0_i32, %c0_i32_0 : i32, i32
  }
  func.func @transform_2(%arg0: i32) -> (i32, i32) {
    %c0_i32 = arith.constant 0 : i32
    %c0_i32_0 = arith.constant 0 : i32
    %c0_i32_1 = arith.constant 0 : i32
    return %c0_i32, %c0_i32_0 : i32, i32
  }
  func.func @transform_3(%arg0: i32) -> (i32, i32) {
    %c0_i32 = arith.constant 0 : i32
    %c0_i32_0 = arith.constant 0 : i32
    %c0_i32_1 = arith.constant 0 : i32
    return %c0_i32, %c0_i32_0 : i32, i32
  }
  func.func @transform_4(%arg0: i32) -> (i32, i32) {
    %c0_i32 = arith.constant 0 : i32
    %c0_i32_0 = arith.constant 0 : i32
    %c0_i32_1 = arith.constant 0 : i32
    return %c0_i32, %c0_i32_0 : i32, i32
  }
  func.func @transform_5(%arg0: i32) -> (i32, i32) {
    %c0_i32 = arith.constant 0 : i32
    %c0_i32_0 = arith.constant 0 : i32
    %c0_i32_1 = arith.constant 0 : i32
    return %c0_i32, %c0_i32_0 : i32, i32
  }
  func.func @transform_6(%arg0: i32) -> (i32, i32) {
    %c0_i32 = arith.constant 0 : i32
    %c0_i32_0 = arith.constant 0 : i32
    %c0_i32_1 = arith.constant 0 : i32
    return %c0_i32, %c0_i32_0 : i32, i32
  }
  func.func @transform_7(%arg0: i32) -> (i32, i32) {
    %c0_i32 = arith.constant 0 : i32
    %c0_i32_0 = arith.constant 0 : i32
    %c0_i32_1 = arith.constant 0 : i32
    return %c0_i32, %c0_i32_0 : i32, i32
  }
  func.func @transform_8(%arg0: i32) -> (i32, i32) {
    %c0_i32 = arith.constant 0 : i32
    %c0_i32_0 = arith.constant 0 : i32
    %c0_i32_1 = arith.constant 0 : i32
    return %c0_i32, %c0_i32_0 : i32, i32
  }
  func.func @transform_9(%arg0: i32) -> (i32, i32) {
    %c0_i32 = arith.constant 0 : i32
    %c0_i32_0 = arith.constant 0 : i32
    return %c0_i32, %arg0 : i32, i32
  }
}

</mosaic_0001>

<llo_original>
// kernel: tpu_custom_call.1
$region0: #{tpu_custom_call.1}
  #allocation0 [shape = 'u32[]', space=smem, size = 0x4, offset = 0x4, fixed_abs, tag = 'smem constant byte address 0x4 - core index']
  #allocation1 [shape = 'u32[72,128]{1,0:T(1,128)}', space=vmem, size = 0x9000, scoped, tag = 'internal scratch']
  #allocation2 [shape = 'f32[1,1]{1,0:T(1,128)S(1)}', space=vmem, size = 0x200, scoped, tag = 'scoped memory for tpu_custom_call.1']
  %s0 = inlined_call_operand.vmem [shape: bf16[6,512], index: 0, kind: input, shape index: {}]
  %s1 = inlined_call_operand.vmem [shape: bf16[32,6], index: 1, kind: input, shape index: {}]
  %s2 = inlined_call_operand.vmem [shape: f32[32,1], index: 2, kind: input, shape index: {}]
  %s3 = inlined_call_operand.vmem [shape: bf16[32,32], index: 3, kind: input, shape index: {}]
  %s4 = inlined_call_operand.vmem [shape: f32[32,1], index: 4, kind: input, shape index: {}]
  %s5 = inlined_call_operand.vmem [shape: bf16[32,32], index: 5, kind: input, shape index: {}]
  %s6 = inlined_call_operand.vmem [shape: f32[32,1], index: 6, kind: input, shape index: {}]
  %s7 = inlined_call_operand.vmem [shape: bf16[1,32], index: 7, kind: input, shape index: {}]
  %s8 = inlined_call_operand.<no memory space> [shape: f32[1,1], index: 8, kind: input, shape index: {}]
  %s9 = inlined_call_operand.hbm [shape: f32[1,512], index: 9, kind: output, shape index: {}]
  %s10 = sld [smem:[#allocation0]]
  $region69: #{tpu_custom_call.1} parent=0
    _
  %s12 = ssub.s32 1, %s10
  %s13 = scalar_select 0, %s12, %s10
  %v14 = vstv %s8
  %15 = vst [vmem:[#allocation2] sm:$0x1] %v14
  $region1: #{tpu_custom_call.1} parent=0
    #allocation3 [shape = 'u8[1024]{0}', space=vmem, size = 0x400, scoped, tag = 'output window, operand 0']
    #allocation4 [shape = 's32[2]{0}', space=sflag, size = 0x8, scoped, tag = 'scoped memory for tpu_custom_call.1']
    %16 = vsyncpa [#allocation4], 0
    %s17 = scalar_lea.sflag [#allocation4], 1
    %18 = vsyncpa %s17, 0
    loop: start=0, step=1, limit=6
    $region2: #{tpu_custom_call.1} parent=1 // loop_pre_header
      _
    $region3: #{tpu_custom_call.1} parent=1 // loop_header
      %s20 = sphi 0, %s24
      %p21 = scmp.ge.s32.totalorder %s20, 6
      %s30 = sphi 0, %s32
      %s33 = sphi 0, %s30
      %s34 = sphi 0, %s33
      %s50 = sphi 0, %s34
      %s54 = sphi 0, %s54
      %s56 = sphi 0, %s54
      %s57 = sphi 0, %s56
      %s71 = sphi 0, %s57
      %s75 = sphi 0, %s75
      %s77 = sphi 0, %s75
      %s78 = sphi 0, %s77
      %s92 = sphi 0, %s78
      %s96 = sphi 0, %s96
      %s98 = sphi 0, %s96
      %s99 = sphi 0, %s98
      %s113 = sphi 0, %s99
      %s117 = sphi 0, %s117
      %s119 = sphi 0, %s117
      %s120 = sphi 0, %s119
      %s134 = sphi 0, %s120
      %s138 = sphi 0, %s138
      %s140 = sphi 0, %s138
      %s141 = sphi 0, %s140
      %s155 = sphi 0, %s141
      %s159 = sphi 0, %s159
      %s161 = sphi 0, %s159
      %s162 = sphi 0, %s161
      %s176 = sphi 0, %s162
      %s180 = sphi 0, %s180
      %s182 = sphi 0, %s180
      %s183 = sphi 0, %s182
      %s197 = sphi 0, %s183
      %s201 = sphi 0, %s201
      %s203 = sphi 0, %s201
      %s204 = sphi 0, %s203
      %s218 = sphi 0, %s204
      %s224 = sphi 0, %s226
      %s227 = sphi 0, %s224
      %s228 = sphi 0, %s227
      %s244 = sphi 0, %s228
    $region4: #{tpu_custom_call.1} parent=1 // loop_header_branch
      %23 = sbr.rel (%p21) target = $region8
    $region5: #{tpu_custom_call.1} parent=1 // loop_body
      %s25 = ssub.s32 %s20, 1
      %s26 = ssub.s32 %s20, 2
      %s27 = sadd.s32 %s20, 1
      %s28 = ssub.s32 %s20, %s27
      %p29 = scmp.eq.s32.totalorder %s28, 0
      %s31 = sadd.s32 %s30, 1
      %s32 = scalar_select %p29, %s30, %s31
      %p35 = pneg %p29
      %p36 = scmp.eq.s32.totalorder %s20, 3
      %p37 = por %p35, %p36
      %p38 = scmp.ne.s32.totalorder %s30, %s33
      %p39 = scmp.eq.s32.totalorder %s20, 0
      %p40 = por %p38, %p39
      %p41 = scmp.ne.s32.totalorder %s30, %s33
      %p42 = scmp.eq.s32.totalorder %s25, 3
      %p43 = por %p41, %p42
      %p44 = scmp.ne.s32.totalorder %s33, %s34
      %p45 = scmp.eq.s32.totalorder %s25, 0
      %p46 = por %p44, %p45
      %p47 = scmp.ne.s32.totalorder %s33, %s34
      %p48 = scmp.eq.s32.totalorder %s26, 3
      %p49 = por %p47, %p48
      %p51 = scmp.ne.s32.totalorder %s34, %s50
      %p52 = scmp.eq.s32.totalorder %s26, 0
      %p53 = por %p51, %p52
      %s55 = sadd.s32 %s54, 1
      %p58 = scmp.eq.s32.totalorder %s20, 3
      %p59 = scmp.ne.s32.totalorder %s54, %s56
      %p60 = scmp.eq.s32.totalorder %s20, 0
      %p61 = por %p59, %p60
      %p62 = scmp.ne.s32.totalorder %s54, %s56
      %p63 = scmp.eq.s32.totalorder %s25, 3
      %p64 = por %p62, %p63
      %p65 = scmp.ne.s32.totalorder %s56, %s57
      %p66 = scmp.eq.s32.totalorder %s25, 0
      %p67 = por %p65, %p66
      %p68 = scmp.ne.s32.totalorder %s56, %s57
      %p69 = scmp.eq.s32.totalorder %s26, 3
      %p70 = por %p68, %p69
      %p72 = scmp.ne.s32.totalorder %s57, %s71
      %p73 = scmp.eq.s32.totalorder %s26, 0
      %p74 = por %p72, %p73
      %s76 = sadd.s32 %s75, 1
      %p79 = scmp.eq.s32.totalorder %s20, 3
      %p80 = scmp.ne.s32.totalorder %s75, %s77
      %p81 = scmp.eq.s32.totalorder %s20, 0
      %p82 = por %p80, %p81
      %p83 = scmp.ne.s32.totalorder %s75, %s77
      %p84 = scmp.eq.s32.totalorder %s25, 3
      %p85 = por %p83, %p84
      %p86 = scmp.ne.s32.totalorder %s77, %s78
      %p87 = scmp.eq.s32.totalorder %s25, 0
      %p88 = por %p86, %p87
      %p89 = scmp.ne.s32.totalorder %s77, %s78
      %p90 = scmp.eq.s32.totalorder %s26, 3
      %p91 = por %p89, %p90
      %p93 = scmp.ne.s32.totalorder %s78, %s92
      %p94 = scmp.eq.s32.totalorder %s26, 0
      %p95 = por %p93, %p94
      %s97 = sadd.s32 %s96, 1
      %p100 = scmp.eq.s32.totalorder %s20, 3
      %p101 = scmp.ne.s32.totalorder %s96, %s98
      %p102 = scmp.eq.s32.totalorder %s20, 0
      %p103 = por %p101, %p102
      %p104 = scmp.ne.s32.totalorder %s96, %s98
      %p105 = scmp.eq.s32.totalorder %s25, 3
      %p106 = por %p104, %p105
      %p107 = scmp.ne.s32.totalorder %s98, %s99
      %p108 = scmp.eq.s32.totalorder %s25, 0
      %p109 = por %p107, %p108
      %p110 = scmp.ne.s32.totalorder %s98, %s99
      %p111 = scmp.eq.s32.totalorder %s26, 3
      %p112 = por %p110, %p111
      %p114 = scmp.ne.s32.totalorder %s99, %s113
      %p115 = scmp.eq.s32.totalorder %s26, 0
      %p116 = por %p114, %p115
      %s118 = sadd.s32 %s117, 1
      %p121 = scmp.eq.s32.totalorder %s20, 3
      %p122 = scmp.ne.s32.totalorder %s117, %s119
      %p123 = scmp.eq.s32.totalorder %s20, 0
      %p124 = por %p122, %p123
      %p125 = scmp.ne.s32.totalorder %s117, %s119
      %p126 = scmp.eq.s32.totalorder %s25, 3
      %p127 = por %p125, %p126
      %p128 = scmp.ne.s32.totalorder %s119, %s120
      %p129 = scmp.eq.s32.totalorder %s25, 0
      %p130 = por %p128, %p129
      %p131 = scmp.ne.s32.totalorder %s119, %s120
      %p132 = scmp.eq.s32.totalorder %s26, 3
      %p133 = por %p131, %p132
      %p135 = scmp.ne.s32.totalorder %s120, %s134
      %p136 = scmp.eq.s32.totalorder %s26, 0
      %p137 = por %p135, %p136
      %s139 = sadd.s32 %s138, 1
      %p142 = scmp.eq.s32.totalorder %s20, 3
      %p143 = scmp.ne.s32.totalorder %s138, %s140
      %p144 = scmp.eq.s32.totalorder %s20, 0
      %p145 = por %p143, %p144
      %p146 = scmp.ne.s32.totalorder %s138, %s140
      %p147 = scmp.eq.s32.totalorder %s25, 3
      %p148 = por %p146, %p147
      %p149 = scmp.ne.s32.totalorder %s140, %s141
      %p150 = scmp.eq.s32.totalorder %s25, 0
      %p151 = por %p149, %p150
      %p152 = scmp.ne.s32.totalorder %s140, %s141
      %p153 = scmp.eq.s32.totalorder %s26, 3
      %p154 = por %p152, %p153
      %p156 = scmp.ne.s32.totalorder %s141, %s155
      %p157 = scmp.eq.s32.totalorder %s26, 0
      %p158 = por %p156, %p157
      %s160 = sadd.s32 %s159, 1
      %p163 = scmp.eq.s32.totalorder %s20, 3
      %p164 = scmp.ne.s32.totalorder %s159, %s161
      %p165 = scmp.eq.s32.totalorder %s20, 0
      %p166 = por %p164, %p165
      %p167 = scmp.ne.s32.totalorder %s159, %s161
      %p168 = scmp.eq.s32.totalorder %s25, 3
      %p169 = por %p167, %p168
      %p170 = scmp.ne.s32.totalorder %s161, %s162
      %p171 = scmp.eq.s32.totalorder %s25, 0
      %p172 = por %p170, %p171
      %p173 = scmp.ne.s32.totalorder %s161, %s162
      %p174 = scmp.eq.s32.totalorder %s26, 3
      %p175 = por %p173, %p174
      %p177 = scmp.ne.s32.totalorder %s162, %s176
      %p178 = scmp.eq.s32.totalorder %s26, 0
      %p179 = por %p177, %p178
      %s181 = sadd.s32 %s180, 1
      %p184 = scmp.eq.s32.totalorder %s20, 3
      %p185 = scmp.ne.s32.totalorder %s180, %s182
      %p186 = scmp.eq.s32.totalorder %s20, 0
      %p187 = por %p185, %p186
      %p188 = scmp.ne.s32.totalorder %s180, %s182
      %p189 = scmp.eq.s32.totalorder %s25, 3
      %p190 = por %p188, %p189
      %p191 = scmp.ne.s32.totalorder %s182, %s183
      %p192 = scmp.eq.s32.totalorder %s25, 0
      %p193 = por %p191, %p192
      %p194 = scmp.ne.s32.totalorder %s182, %s183
      %p195 = scmp.eq.s32.totalorder %s26, 3
      %p196 = por %p194, %p195
      %p198 = scmp.ne.s32.totalorder %s183, %s197
      %p199 = scmp.eq.s32.totalorder %s26, 0
      %p200 = por %p198, %p199
      %s202 = sadd.s32 %s201, 1
      %p205 = scmp.eq.s32.totalorder %s20, 3
      %p206 = scmp.ne.s32.totalorder %s201, %s203
      %p207 = scmp.eq.s32.totalorder %s20, 0
      %p208 = por %p206, %p207
      %p209 = scmp.ne.s32.totalorder %s201, %s203
      %p210 = scmp.eq.s32.totalorder %s25, 3
      %p211 = por %p209, %p210
      %p212 = scmp.ne.s32.totalorder %s203, %s204
      %p213 = scmp.eq.s32.totalorder %s25, 0
      %p214 = por %p212, %p213
      %p215 = scmp.ne.s32.totalorder %s203, %s204
      %p216 = scmp.eq.s32.totalorder %s26, 3
      %p217 = por %p215, %p216
      %p219 = scmp.ne.s32.totalorder %s204, %s218
      %p220 = scmp.eq.s32.totalorder %s26, 0
      %p221 = por %p219, %p220
      %s222 = ssub.s32 %s20, %s27
      %p223 = scmp.eq.s32.totalorder %s222, 0
      %s225 = sadd.s32 %s224, 1
      %s226 = scalar_select %p223, %s224, %s225
      %p229 = pneg %p223
      %p230 = scmp.eq.s32.totalorder %s20, 3
      %p231 = por %p229, %p230
      %p232 = scmp.ne.s32.totalorder %s224, %s227
      %p233 = scmp.eq.s32.totalorder %s20, 0
      %p234 = por %p232, %p233
      %p235 = scmp.ne.s32.totalorder %s224, %s227
      %p236 = scmp.eq.s32.totalorder %s25, 3
      %p237 = por %p235, %p236
      %p238 = scmp.ne.s32.totalorder %s227, %s228
      %p239 = scmp.eq.s32.totalorder %s25, 0
      %p240 = por %p238, %p239
      %p241 = scmp.ne.s32.totalorder %s227, %s228
      %p242 = scmp.eq.s32.totalorder %s26, 3
      %p243 = por %p241, %p242
      %p245 = scmp.ne.s32.totalorder %s228, %s244
      %p246 = scmp.eq.s32.totalorder %s26, 0
      %p247 = por %p245, %p246
      %p248 = scmp.le.s32.totalorder 1, %s20
      %p249 = scmp.lt.s32.totalorder %s20, 5
      %p250 = pnand %p248, %p249
      %p251 = pneg %p250
      // Predicated region
      $region9: #{tpu_custom_call.1} parent=5 // pred_check
        _
      $region10: #{tpu_custom_call.1} parent=5 // pred_check_branch
        %253 = sbr.rel (%p250) target = $region12
      $region11: #{tpu_custom_call.1} parent=5 // pred_region
        %s254 = ssub.s32 %s20, 1
        // Predicated region
        $region13: #{tpu_custom_call.1} parent=11 // pred_check
          %p255 = pneg %p67
        $region14: #{tpu_custom_call.1} parent=11 // pred_check_branch
          %257 = sbr.rel (%p255) target = $region16
        $region15: #{tpu_custom_call.1} parent=11 // pred_region
          _
        $region16: #{tpu_custom_call.1} parent=11 // pred_fallthru
          _
        // Predicated region
        $region17: #{tpu_custom_call.1} parent=11 // pred_check
          %p258 = pneg %p88
        $region18: #{tpu_custom_call.1} parent=11 // pred_check_branch
          %260 = sbr.rel (%p258) target = $region20
        $region19: #{tpu_custom_call.1} parent=11 // pred_region
          _
        $region20: #{tpu_custom_call.1} parent=11 // pred_fallthru
          _
        // Predicated region
        $region21: #{tpu_custom_call.1} parent=11 // pred_check
          %p261 = pneg %p109
        $region22: #{tpu_custom_call.1} parent=11 // pred_check_branch
          %263 = sbr.rel (%p261) target = $region24
        $region23: #{tpu_custom_call.1} parent=11 // pred_region
          _
        $region24: #{tpu_custom_call.1} parent=11 // pred_fallthru
          _
        // Predicated region
        $region25: #{tpu_custom_call.1} parent=11 // pred_check
          %p264 = pneg %p130
        $region26: #{tpu_custom_call.1} parent=11 // pred_check_branch
          %266 = sbr.rel (%p264) target = $region28
        $region27: #{tpu_custom_call.1} parent=11 // pred_region
          _
        $region28: #{tpu_custom_call.1} parent=11 // pred_fallthru
          _
        // Predicated region
        $region29: #{tpu_custom_call.1} parent=11 // pred_check
          %p267 = pneg %p151
        $region30: #{tpu_custom_call.1} parent=11 // pred_check_branch
          %269 = sbr.rel (%p267) target = $region32
        $region31: #{tpu_custom_call.1} parent=11 // pred_region
          _
        $region32: #{tpu_custom_call.1} parent=11 // pred_fallthru
          _
        // Predicated region
        $region33: #{tpu_custom_call.1} parent=11 // pred_check
          %p270 = pneg %p172
        $region34: #{tpu_custom_call.1} parent=11 // pred_check_branch
          %272 = sbr.rel (%p270) target = $region36
        $region35: #{tpu_custom_call.1} parent=11 // pred_region
          _
        $region36: #{tpu_custom_call.1} parent=11 // pred_fallthru
          _
        // Predicated region
        $region37: #{tpu_custom_call.1} parent=11 // pred_check
          %p273 = pneg %p193
        $region38: #{tpu_custom_call.1} parent=11 // pred_check_branch
          %275 = sbr.rel (%p273) target = $region40
        $region39: #{tpu_custom_call.1} parent=11 // pred_region
          _
        $region40: #{tpu_custom_call.1} parent=11 // pred_fallthru
          _
        // Predicated region
        $region41: #{tpu_custom_call.1} parent=11 // pred_check
          %p276 = pneg %p214
        $region42: #{tpu_custom_call.1} parent=11 // pred_check_branch
          %278 = sbr.rel (%p276) target = $region44
        $region43: #{tpu_custom_call.1} parent=11 // pred_region
          _
        $region44: #{tpu_custom_call.1} parent=11 // pred_fallthru
          _
      $region12: #{tpu_custom_call.1} parent=5 // pred_fallthru
        _
      %p279 = scmp.lt.s32.totalorder %s20, 4
      // Predicated region
      $region45: #{tpu_custom_call.1} parent=5 // pred_check
        %p280 = pneg %p279
      $region46: #{tpu_custom_call.1} parent=5 // pred_check_branch
        %282 = sbr.rel (%p280) target = $region48
      $region47: #{tpu_custom_call.1} parent=5 // pred_region
        // Predicated region
        $region49: #{tpu_custom_call.1} parent=47 // pred_check
          %p283 = pneg %p40
        $region50: #{tpu_custom_call.1} parent=47 // pred_check_branch
          %285 = sbr.rel (%p283) target = $region52
        $region51: #{tpu_custom_call.1} parent=47 // pred_region
          %p286 = scmp.lt.s32.totalorder %s20, 3
          %s287 = scalar_select %p286, %s20, 3
          %s288 = smul.addr %s287, 4
          %s289 = scalar_lea.vmem %s0, %s288
        $region52: #{tpu_custom_call.1} parent=47 // pred_fallthru
          _
      $region48: #{tpu_custom_call.1} parent=5 // pred_fallthru
        _
      %p290 = scmp.le.s32.totalorder 1, %s20
      %p291 = scmp.lt.s32.totalorder %s20, 5
      %p292 = pnand %p290, %p291
      %p293 = pneg %p292
      // Predicated region
      $region53: #{tpu_custom_call.1} parent=5 // pred_check
        _
      $region54: #{tpu_custom_call.1} parent=5 // pred_check_branch
        %295 = sbr.rel (%p292) target = $region56
      $region55: #{tpu_custom_call.1} parent=5 // pred_region
        %s296 = ssub.s32 %s20, 1
        %p297 = scmp.lt.s32.totalorder %s25, 3
        %s298 = scalar_select %p297, %s25, 3
        %s299 = smul.addr %s298, 4
        %s300 = scalar_lea.vmem %s0, %s299
        %p301 = pneg %p46
        %p302 = pneg %p43
        %p303 = pneg %p67
        %p304 = pneg %p64
        %p305 = pneg %p88
        %p306 = pneg %p85
        %p307 = pneg %p109
        %p308 = pneg %p106
        %p309 = pneg %p130
        %p310 = pneg %p127
        %p311 = pneg %p151
        %p312 = pneg %p148
        %p313 = pneg %p172
        %p314 = pneg %p169
        %p315 = pneg %p193
        %p316 = pneg %p190
        %p317 = pneg %p214
        %p318 = pneg %p211
        %p319 = pneg %p240
        %p320 = pneg %p237
        %s321 = sand.u32 %s227, 1
        %s322 = scalar_lea.sflag [#allocation4], %s321
        %s323 = sand.u32 %s227, 1
        %s324 = scalar_lea.vmem [#allocation3], %s323
        %p325 = scmp.lt.s32.totalorder %s25, 3
        %s326 = scalar_select %p325, %s25, 3
        %s327 = smul.addr %s326, 4
        %s328 = scalar_lea.vmem %s0, %s327
        %v330 = vld [vmem:[%s328] sm:$0x7]
        %v331 = vld [vmem:[%s1] sm:$0xf]
        %v332 = vld [vmem:[%s1 + $0x4] sm:$0xf]
        %v333 = vld [vmem:[%s1 + $0x8] sm:$0xf]
        %v334 = vld [vmem:[%s1 + $0xc] sm:$0xf]
        %v335 = vld [vmem:[%s2] sm:$0xff]
        %v336 = vld [vmem:[%s2 + $0x8] sm:$0xff]
        %v337 = vld [vmem:[%s2 + $0x10] sm:$0xff]
        %v338 = vld [vmem:[%s2 + $0x18] sm:$0xff]
        %340 = vset.pattern.permute.xlu0 0
        %341 = vperm.xlu0 %340, %v335
        %v342 = vpop.permute.xlu0 %341
        %345 = vset.pattern.permute.xlu0 0
        %346 = vperm.xlu0 %345, %v336
        %v347 = vpop.permute.xlu0 %346
        %350 = vset.pattern.permute.xlu0 0
        %351 = vperm.xlu0 %350, %v337
        %v352 = vpop.permute.xlu0 %351
        %355 = vset.pattern.permute.xlu0 0
        %356 = vperm.xlu0 %355, %v338
        %v357 = vpop.permute.xlu0 %356
        %v363 = vunpack.c.l.b16 %v331
        %v364 = vunpack.c.l.b16 %v332
        %v365 = vunpack.c.l.b16 %v333
        %v366 = vunpack.c.l.b16 %v334
        %v367 = vpack.c.b16 %v364, %v363
        %v368 = vpack.c.b16 %v366, %v365
        %vm369 = vcmask 48128
        %v371 = vsel %vm369, %v367, 0
        %v374 = vsel %vm369, %v368, 0
        %vm376 = vcmask 1042432
        %v378 = vsel %vm376, %v330, 0
        %380 = vmatpush.bf16.msra.mxu0 0
        %381 = vmatpush.bf16.msra.mxu0 0
        %382 = vmatpush.bf16.msra.mxu0 0
        %383 = vmatpush.bf16.msra.mxu0 0
        %384 = vmatpush.bf16.msra.mxu0 0
        %385 = vmatpush.bf16.msra.mxu0 0
        %386 = vmatpush.bf16.msra.mxu0 0
        %387 = vmatpush.bf16.msra.mxu0 %v378
        %388 = vmatmul.bf16.gmra.mxu0 %v371
        %v389 = vpop.f32.mrf.mxu0
        %v390 = vadd.f32 %v342, %v389
        %v391 = vpop.f32.mrf.mxu0
        %v392 = vadd.f32 %v347, %v391
        %393 = vmatmul.bf16.gmra.mxu0 %v374
        %v394 = vpop.f32.mrf.mxu0
        %v395 = vadd.f32 %v352, %v394
        %v396 = vpop.f32.mrf.mxu0
        %v397 = vadd.f32 %v357, %v396
        %398 = vdwg.mxu0
        %v399 = vmul.f32 %v390, 0.01
        %v400 = vmul.f32 %v392, 0.01
        %v401 = vmul.f32 %v395, 0.01
        %v402 = vmul.f32 %v397, 0.01
        %v403 = vmax.f32 %v390, %v399
        %v404 = vmax.f32 %v392, %v400
        %v405 = vmax.f32 %v395, %v401
        %v406 = vmax.f32 %v397, %v402
        %v407 = vpack.c.bf16 %v404, %v403
        %v408 = vpack.c.bf16 %v406, %v405
        %v409 = vld [vmem:[%s3] sm:$0xf]
        %v410 = vld [vmem:[%s3 + $0x4] sm:$0xf]
        %v411 = vld [vmem:[%s3 + $0x8] sm:$0xf]
        %v412 = vld [vmem:[%s3 + $0xc] sm:$0xf]
        %v413 = vld [vmem:[%s4] sm:$0xff]
        %v414 = vld [vmem:[%s4 + $0x8] sm:$0xff]
        %v415 = vld [vmem:[%s4 + $0x10] sm:$0xff]
        %v416 = vld [vmem:[%s4 + $0x18] sm:$0xff]
        %418 = vset.pattern.permute.xlu0 0
        %419 = vperm.xlu0 %418, %v413
        %v420 = vpop.permute.xlu0 %419
        %423 = vset.pattern.permute.xlu0 0
        %424 = vperm.xlu0 %423, %v414
        %v425 = vpop.permute.xlu0 %424
        %428 = vset.pattern.permute.xlu0 0
        %429 = vperm.xlu0 %428, %v415
        %v430 = vpop.permute.xlu0 %429
        %433 = vset.pattern.permute.xlu0 0
        %434 = vperm.xlu0 %433, %v416
        %v435 = vpop.permute.xlu0 %434
        %v441 = vunpack.c.l.b16 %v409
        %v442 = vunpack.c.l.b16 %v410
        %v443 = vunpack.c.l.b16 %v411
        %v444 = vunpack.c.l.b16 %v412
        %v445 = vpack.c.b16 %v442, %v441
        %v446 = vpack.c.b16 %v444, %v443
        %vm447 = vcmask 261120
        %v449 = vsel %vm447, %v445, 0
        %v452 = vsel %vm447, %v446, 0
        %454 = vmatpush.bf16.msra.mxu0 0
        %455 = vmatpush.bf16.msra.mxu0 0
        %456 = vmatpush.bf16.msra.mxu0 0
        %457 = vmatpush.bf16.msra.mxu0 0
        %458 = vmatpush.bf16.msra.mxu0 0
        %459 = vmatpush.bf16.msra.mxu0 0
        %460 = vmatpush.bf16.msra.mxu0 %v408
        %461 = vmatpush.bf16.msra.mxu0 %v407
        %462 = vmatmul.bf16.gmra.mxu0 %v449
        %v463 = vpop.f32.mrf.mxu0
        %v464 = vadd.f32 %v420, %v463
        %v465 = vpop.f32.mrf.mxu0
        %v466 = vadd.f32 %v425, %v465
        %467 = vmatmul.bf16.gmra.mxu0 %v452
        %v468 = vpop.f32.mrf.mxu0
        %v469 = vadd.f32 %v430, %v468
        %v470 = vpop.f32.mrf.mxu0
        %v471 = vadd.f32 %v435, %v470
        %472 = vdwg.mxu0
        %v473 = vmul.f32 %v464, 0.01
        %v474 = vmul.f32 %v466, 0.01
        %v475 = vmul.f32 %v469, 0.01
        %v476 = vmul.f32 %v471, 0.01
        %v477 = vmax.f32 %v464, %v473
        %v478 = vmax.f32 %v466, %v474
        %v479 = vmax.f32 %v469, %v475
        %v480 = vmax.f32 %v471, %v476
        %v481 = vpack.c.bf16 %v478, %v477
        %v482 = vpack.c.bf16 %v480, %v479
        %v483 = vld [vmem:[%s5] sm:$0xf]
        %v484 = vld [vmem:[%s5 + $0x4] sm:$0xf]
        %v485 = vld [vmem:[%s5 + $0x8] sm:$0xf]
        %v486 = vld [vmem:[%s5 + $0xc] sm:$0xf]
        %v487 = vld [vmem:[%s6] sm:$0xff]
        %v488 = vld [vmem:[%s6 + $0x8] sm:$0xff]
        %v489 = vld [vmem:[%s6 + $0x10] sm:$0xff]
        %v490 = vld [vmem:[%s6 + $0x18] sm:$0xff]
        %492 = vset.pattern.permute.xlu0 0
        %493 = vperm.xlu0 %492, %v487
        %v494 = vpop.permute.xlu0 %493
        %497 = vset.pattern.permute.xlu0 0
        %498 = vperm.xlu0 %497, %v488
        %v499 = vpop.permute.xlu0 %498
        %502 = vset.pattern.permute.xlu0 0
        %503 = vperm.xlu0 %502, %v489
        %v504 = vpop.permute.xlu0 %503
        %507 = vset.pattern.permute.xlu0 0
        %508 = vperm.xlu0 %507, %v490
        %v509 = vpop.permute.xlu0 %508
        %v515 = vunpack.c.l.b16 %v483
        %v516 = vunpack.c.l.b16 %v484
        %v517 = vunpack.c.l.b16 %v485
        %v518 = vunpack.c.l.b16 %v486
        %v519 = vpack.c.b16 %v516, %v515
        %v520 = vpack.c.b16 %v518, %v517
        %v522 = vsel %vm447, %v519, 0
        %v525 = vsel %vm447, %v520, 0
        %527 = vmatpush.bf16.msra.mxu0 0
        %528 = vmatpush.bf16.msra.mxu0 0
        %529 = vmatpush.bf16.msra.mxu0 0
        %530 = vmatpush.bf16.msra.mxu0 0
        %531 = vmatpush.bf16.msra.mxu0 0
        %532 = vmatpush.bf16.msra.mxu0 0
        %533 = vmatpush.bf16.msra.mxu0 %v482
        %534 = vmatpush.bf16.msra.mxu0 %v481
        %535 = vmatmul.bf16.gmra.mxu0 %v522
        %v536 = vpop.f32.mrf.mxu0
        %v537 = vadd.f32 %v494, %v536
        %v538 = vpop.f32.mrf.mxu0
        %v539 = vadd.f32 %v499, %v538
        %540 = vmatmul.bf16.gmra.mxu0 %v525
        %v541 = vpop.f32.mrf.mxu0
        %v542 = vadd.f32 %v504, %v541
        %v543 = vpop.f32.mrf.mxu0
        %v544 = vadd.f32 %v509, %v543
        %545 = vdwg.mxu0
        %v546 = vmul.f32 %v537, 0.01
        %v547 = vmul.f32 %v539, 0.01
        %v548 = vmul.f32 %v542, 0.01
        %v549 = vmul.f32 %v544, 0.01
        %v550 = vmax.f32 %v537, %v546
        %v551 = vmax.f32 %v539, %v547
        %v552 = vmax.f32 %v542, %v548
        %v553 = vmax.f32 %v544, %v549
        %v554 = vpack.c.bf16 %v551, %v550
        %v555 = vpack.c.bf16 %v553, %v552
        %v556 = vld [vmem:[%s7] sm:$0x1]
        %v557 = vld [vmem:[#allocation2] sm:$0x1]
        %559 = vset.pattern.permute.xlu0 0
        %560 = vperm.xlu0 %559, %v557
        %v561 = vpop.permute.xlu0 %560
        %v563 = vperm.slane %v561, 0
        %v565 = vsel %vm447, %v556, 0
        %567 = vmatpush.bf16.msra.mxu0 0
        %568 = vmatpush.bf16.msra.mxu0 0
        %569 = vmatpush.bf16.msra.mxu0 0
        %570 = vmatpush.bf16.msra.mxu0 0
        %571 = vmatpush.bf16.msra.mxu0 0
        %572 = vmatpush.bf16.msra.mxu0 0
        %573 = vmatpush.bf16.msra.mxu0 %v555
        %574 = vmatpush.bf16.msra.mxu0 %v554
        %575 = vmatmul.bf16.gmra.mxu0 %v565
        %v576 = vpop.f32.mrf.mxu0
        %v577 = vadd.f32 %v563, %v576
        %v578 = vpop.f32.mrf.mxu0
        %579 = vdwg.mxu0
        %580 = vst [vmem:[%s324] sm:$0x1] %v577
        %s581 = sand.u32 %s227, 1
        %s582 = scalar_lea.sflag [#allocation4], %s581
        %s583 = sand.u32 %s227, 1
        %s584 = scalar_lea.vmem [#allocation3], %s583
        // Predicated region
        $region57: #{tpu_custom_call.1} parent=55 // pred_check
          %p585 = pneg %p237
        $region58: #{tpu_custom_call.1} parent=55 // pred_check_branch
          %587 = sbr.rel (%p585) target = $region60
        $region59: #{tpu_custom_call.1} parent=55 // pred_region
          %589 = vsyncadd %s582, 0
          %s590 = scalar_lea.hbm %s9, %s25
          %s592 = sshll.u32 %s584, 4
          %s593 = int_to_ptr.vmem [resolvable:$true] %s592
          %s594 = sshll.u32 %s590, 4
          %s595 = int_to_ptr.hbm [resolvable:$true] %s594
          %597 = dma.vmem_to_hbm [thread:$0]  %s593, 16, %s595, %s582
        $region60: #{tpu_custom_call.1} parent=55 // pred_fallthru
          _
      $region56: #{tpu_custom_call.1} parent=5 // pred_fallthru
        _
      %p598 = scmp.le.s32.totalorder 2, %s20
      // Predicated region
      $region61: #{tpu_custom_call.1} parent=5 // pred_check
        %p599 = pneg %p598
      $region62: #{tpu_custom_call.1} parent=5 // pred_check_branch
        %601 = sbr.rel (%p599) target = $region64
      $region63: #{tpu_custom_call.1} parent=5 // pred_region
        %s602 = ssub.s32 %s20, 2
        // Predicated region
        $region65: #{tpu_custom_call.1} parent=63 // pred_check
          %p603 = pneg %p243
        $region66: #{tpu_custom_call.1} parent=63 // pred_check_branch
          %605 = sbr.rel (%p603) target = $region68
        $region67: #{tpu_custom_call.1} parent=63 // pred_region
          %s606 = sand.u32 %s228, 1
          %s607 = scalar_lea.sflag [#allocation4], %s606
          %s608 = sand.u32 %s228, 1
          %s609 = scalar_lea.vmem [#allocation3], %s608
          %611 = dma.done %s607, 16
        $region68: #{tpu_custom_call.1} parent=63 // pred_fallthru
          _
      $region64: #{tpu_custom_call.1} parent=5 // pred_fallthru
        _
    $region6: #{tpu_custom_call.1} parent=1 // loop_footer
      %s24 = sadd.s32 1, %s20
    $region7: #{tpu_custom_call.1} parent=1 // loop_footer_branch
      %19 = sbr.rel target = $region3
    $region8: #{tpu_custom_call.1} parent=1 // loop_exit
      _
    %612 = vsyncpa [#allocation4], 1
    %s613 = scalar_lea.sflag [#allocation4], 1
    %614 = vsyncpa %s613, 1

</llo_original>
